<compile_context>
chip_gen: v7x
topology: tpu7x:2x2x1
jax: 0.10.0
libtpu: 0.0.40
codegen_flags: <defaults>
</compile_context>

<pallas_src>
import functools

import jax
import jax.numpy as jnp
from jax.experimental import pallas as pl
from jax.experimental.pallas import tpu as pltpu


_VOCAB_TILE_CAP = 4096          # lanes per vocab tile (multiple of 128)
_ROW_TILE_CAP = 512             # max sublane rows per tile
_TILE_ELEMS_BUDGET = 1 << 20    # ~4 MiB f32 per (tr, tv) tile -> v7x-safe


# ---------------------------------------------------------------------------
# Phase 1: per-token cross entropy (reduction='none'), tiled over the vocab.
# ---------------------------------------------------------------------------
def _ce_kernel(pred_ref, tgt_ref, ce_ref, m_ref, s_ref, t_ref, *,
               tv, v_total, needs_mask):
    j = pl.program_id(1)

    @pl.when(j == 0)
    def _init():
        m_ref[...] = jnp.full_like(m_ref, -jnp.inf)   # running max
        s_ref[...] = jnp.zeros_like(s_ref)            # running sum(exp)
        t_ref[...] = jnp.zeros_like(t_ref)            # target logit

    x = pred_ref[...].astype(jnp.float32)             # (tr, tv)
    tr_, tv_ = x.shape
    # LOCAL lane index: the '+ j*tv' shift is applied to scalars / the
    # (tr, 1) targets below, never to the full (tr, tv) iota.
    local_col = jax.lax.broadcasted_iota(jnp.int32, (tr_, tv_), 1)
    if needs_mask:                                     # compile-time flag
        x = jnp.where(local_col < (v_total - j * tv), x, -jnp.inf)

    tile_max = jnp.max(x, axis=-1, keepdims=True)      # (tr, 1)
    m_prev = m_ref[...]
    m_new = jnp.maximum(m_prev, tile_max)
    s_ref[...] = (s_ref[...] * jnp.exp(m_prev - m_new)
                  + jnp.sum(jnp.exp(x - m_new), axis=-1, keepdims=True))
    m_ref[...] = m_new

    # Target logit via masked select + reduce (VPU only; no MXU contraction).
    local_tgt = tgt_ref[...] - j * tv                  # (tr, 1)
    hit = local_col == local_tgt                       # (tr, tv)
    t_ref[...] = t_ref[...] + jnp.sum(jnp.where(hit, x, 0.0),
                                      axis=-1, keepdims=True)

    @pl.when(j == pl.num_programs(1) - 1)
    def _finalize():
        ce_ref[...] = m_ref[...] + jnp.log(s_ref[...]) - t_ref[...]


# ---------------------------------------------------------------------------
# Phase 2: Sinkhorn iterations on the collapsed 2-column cost matrix + loss.
# ---------------------------------------------------------------------------
def _sinkhorn_kernel(ce_ref, loss_ref, *, num_iters, tau, k_cols, batch):
    ce = ce_ref[...]                              # (B, S), S on the lane axis
    x0 = -ce / tau                                # real cost column

    def lse_over_s(v):                            # logsumexp along lanes (S)
        m = jnp.max(v, axis=-1, keepdims=True)
        return m + jnp.log(jnp.sum(jnp.exp(v - m), axis=-1, keepdims=True))

    if k_cols > 1:
        km1 = jnp.float32(k_cols - 1)
        p = jnp.full_like(x0, -1e9)               # representative padded column
        for _ in range(num_iters):
            # logsumexp over the K columns of [x0, p, p, ..., p]   (dim 2)
            m = jnp.maximum(x0, p)
            r = m + jnp.log(jnp.exp(x0 - m) + km1 * jnp.exp(p - m))
            x0 = x0 - r
            p = p - r
            # logsumexp over the sequence, per distinct column      (dim 1)
            x0 = x0 - lse_over_s(x0)
            p = p - lse_over_s(p)
        matching_row = jnp.exp(x0) + km1 * jnp.exp(p)
    else:
        for _ in range(num_iters):
            x0 = x0 - x0                          # lse over a single column
            x0 = x0 - lse_over_s(x0)
        matching_row = jnp.exp(x0)

    per_batch = jnp.sum(matching_row * ce, axis=-1, keepdims=True)   # (B, 1)
    loss = jnp.sum(per_batch) / jnp.float32(batch)
    loss_ref[...] = jnp.broadcast_to(loss, (1, 1))


# ---------------------------------------------------------------------------
# Tile selection (respects the (8, 128) / full-dim BlockSpec rule).
# ---------------------------------------------------------------------------
def _sublane_align(dtype):
    # Packed sublane size: 8 for f32, 16 for bf16, 32 for int8/fp8.
    return max(8, 32 // jnp.dtype(dtype).itemsize)


def _round_up(x, m):
    return ((x + m - 1) // m) * m


def _vocab_tile(vocab):
    if vocab <= _VOCAB_TILE_CAP:
        return vocab                    # single full-width tile; no ragged mask
    return _VOCAB_TILE_CAP              # multiple of 128; ragged tail masked


def _row_tile(rows, align, tv):
    budget = min(_ROW_TILE_CAP, max(1, _TILE_ELEMS_BUDGET // max(tv, 1)))
    budget = max(align, (budget // align) * align)
    if rows <= align:
        return rows                     # full dim; always legal
    if rows <= budget:
        # Split into >=2 row tiles when possible (megacore on v7x); the tail
        # tile is clipped by Pallas (cdiv grid), never a giant fallback block.
        half = _round_up(-(-rows // 2), align)
        return half if half < rows else rows
    return budget


# ---------------------------------------------------------------------------
# Wrapper
# ---------------------------------------------------------------------------
def lsaa_loss(predictions, targets, num_iters=20, tau=1.0):
    B, S, V = predictions.shape
    R = B * S
    K = 1 + (V - S) if S < V else 1

    pred2d = predictions.reshape(R, V)              # keep native dtype (bf16 ok)
    tgt2d = targets.reshape(R, 1).astype(jnp.int32)

    tv = _vocab_tile(V)
    tr = _row_tile(R, _sublane_align(predictions.dtype), tv)
    grid = (pl.cdiv(R, tr), pl.cdiv(V, tv))
    needs_mask = (V % tv) != 0                      # statically elided when even

    ce = pl.pallas_call(
        functools.partial(_ce_kernel, tv=tv, v_total=V, needs_mask=needs_mask),
        grid=grid,
        in_specs=[
            pl.BlockSpec((tr, tv), lambda i, j: (i, j)),   # predictions tile
            pl.BlockSpec((tr, 1), lambda i, j: (i, 0)),    # targets per row
        ],
        out_specs=pl.BlockSpec((tr, 1), lambda i, j: (i, 0)),
        out_shape=jax.ShapeDtypeStruct((R, 1), jnp.float32),
        scratch_shapes=[pltpu.VMEM((tr, 1), jnp.float32) for _ in range(3)],
        compiler_params=pltpu.CompilerParams(
            dimension_semantics=("parallel", "arbitrary"),
            vmem_limit_bytes=48 * 1024 * 1024),
    )(pred2d, tgt2d)

    # The (R,1)->(B,S) relayout of the tiny CE vector is left to XLA (cheap);
    # an in-kernel lane-dense store only saves R width-1 stores per row tile.
    loss = pl.pallas_call(
        functools.partial(_sinkhorn_kernel, num_iters=int(num_iters),
                          tau=float(tau), k_cols=K, batch=B),
        out_shape=jax.ShapeDtypeStruct((1, 1), jnp.float32),
        in_specs=[pl.BlockSpec(memory_space=pltpu.MemorySpace.VMEM)],
        out_specs=pl.BlockSpec(memory_space=pltpu.MemorySpace.VMEM),
    )(ce.reshape(B, S))
    return loss[0, 0]


# ---------------------------------------------------------------------------
# Pure-JAX reference (mirrors the PyTorch module line by line).
# ---------------------------------------------------------------------------
def lsaa_loss_ref(predictions, targets, num_iters=20, tau=1.0):
    B, S, V = predictions.shape
    logits = predictions.reshape(-1, V).astype(jnp.float32)
    t = targets.reshape(-1)
    lse = jax.scipy.special.logsumexp(logits, axis=-1)
    ce = lse - jnp.take_along_axis(logits, t[:, None], axis=-1)[:, 0]
    ce = ce.reshape(B, S, 1)
    cost = -ce / tau
    if S < V:
        cost = jnp.concatenate(
            [cost, jnp.full((B, S, V - S), -1e9, dtype=cost.dtype)], axis=-1)
    elif S > V:
        cost = cost[:, :, :V]
    for _ in range(num_iters):
        cost = cost - jax.scipy.special.logsumexp(cost, axis=2, keepdims=True)
        cost = cost - jax.scipy.special.logsumexp(cost, axis=1, keepdims=True)
    matching = jnp.exp(cost)
    return jnp.mean(jnp.sum(matching * ce, axis=(1, 2)))


if __name__ == "__main__":
    cases = [
        (2, 8, 16),     # S < V : padded cost matrix (K = 9), single vocab tile
        (2, 8, 6),      # S > V : truncated cost matrix (K = 1)
        (2, 8, 4096),   # full-cap single vocab tile, no ragged mask
        (2, 8, 5000),   # two vocab tiles with ragged tail mask
        (2, 5, 40),     # ragged rows (R=10): cdiv row grid + clipped tail tile
    ]
    key = jax.random.PRNGKey(0)
    for (B, S, V) in cases:
        key, kp, kt = jax.random.split(key, 3)
        predictions = jax.random.normal(kp, (B, S, V), dtype=jnp.float32)
        targets = jax.random.randint(kt, (B, S), 0, V, dtype=jnp.int32)

        loss = lsaa_loss(predictions, targets, num_iters=20, tau=1.0)
        loss = jax.block_until_ready(loss)
        ref = lsaa_loss_ref(predictions, targets, num_iters=20, tau=1.0)
        assert jnp.allclose(loss, ref, rtol=2e-4, atol=2e-4), (B, S, V, loss, ref)

    print("KERNEL_OK")
</pallas_src>

<mosaic_0001>
module attributes {stable_mosaic.version = 11 : i64} {
  func.func @_ce_kernel(%arg0: i32, %arg1: i32, %arg2: memref<8x16xf32, #tpu.memory_space<vmem>>, %arg3: memref<8x1xi32, #tpu.memory_space<vmem>>, %arg4: memref<8x1xf32, #tpu.memory_space<vmem>>, %arg5: memref<8x1xf32, #tpu.memory_space<vmem>>, %arg6: memref<8x1xf32, #tpu.memory_space<vmem>>, %arg7: memref<8x1xf32, #tpu.memory_space<vmem>>) attributes {dimension_semantics = [#tpu.dimension_semantics<parallel>, #tpu.dimension_semantics<arbitrary>], iteration_bounds = array<i64: 2, 1>, scalar_prefetch = 0 : i64, scratch_operands = 3 : i64, tpu.core_type = #tpu.core_type<tc>, window_params = [{transform_indices = @transform_0, window_bounds = array<i64: 8, 16>}, {transform_indices = @transform_1, window_bounds = array<i64: 8, 1>}, {transform_indices = @transform_2, window_bounds = array<i64: 8, 1>}]} {
    %c0_i32 = arith.constant 0 : i32
    %0 = arith.cmpi eq, %arg1, %c0_i32 : i32
    %1 = arith.extui %0 : i1 to i32
    %c0_i32_0 = arith.constant 0 : i32
    %2 = arith.cmpi ne, %1, %c0_i32_0 : i32
    scf.if %2 {
      %cst_21 = arith.constant 0xFF800000 : f32
      %37 = vector.broadcast %cst_21 : f32 to vector<8x1xf32>
      %c0_22 = arith.constant 0 : index
      %c0_23 = arith.constant 0 : index
      %38 = vector.load %arg5[%c0_22, %c0_23] : memref<8x1xf32, #tpu.memory_space<vmem>>, vector<8x1xf32>
      tpu.vector_store %arg5[%c0_22, %c0_23], %37 {strides = array<i32>} : memref<8x1xf32, #tpu.memory_space<vmem>>, vector<8x1xf32>,
      %cst_24 = arith.constant 0.000000e+00 : f32
      %39 = vector.broadcast %cst_24 : f32 to vector<8x1xf32>
      %c0_25 = arith.constant 0 : index
      %c0_26 = arith.constant 0 : index
      %40 = vector.load %arg6[%c0_25, %c0_26] : memref<8x1xf32, #tpu.memory_space<vmem>>, vector<8x1xf32>
      tpu.vector_store %arg6[%c0_25, %c0_26], %39 {strides = array<i32>} : memref<8x1xf32, #tpu.memory_space<vmem>>, vector<8x1xf32>,
      %cst_27 = arith.constant 0.000000e+00 : f32
      %41 = vector.broadcast %cst_27 : f32 to vector<8x1xf32>
      %c0_28 = arith.constant 0 : index
      %c0_29 = arith.constant 0 : index
      %42 = vector.load %arg7[%c0_28, %c0_29] : memref<8x1xf32, #tpu.memory_space<vmem>>, vector<8x1xf32>
      tpu.vector_store %arg7[%c0_28, %c0_29], %41 {strides = array<i32>} : memref<8x1xf32, #tpu.memory_space<vmem>>, vector<8x1xf32>,
    } else {
    }
    %c0 = arith.constant 0 : index
    %c0_1 = arith.constant 0 : index
    %3 = vector.load %arg2[%c0, %c0_1] : memref<8x16xf32, #tpu.memory_space<vmem>>, vector<8x16xf32>
    %4 = tpu.iota {dimensions = array<i32: 1>} : vector<8x16xi32>
    %cst = arith.constant dense<0xFF800000> : vector<8xf32>
    %5 = vector.multi_reduction <maximumf>, %3, %cst [1] : vector<8x16xf32> to vector<8xf32>
    %6 = vector.shape_cast %5 : vector<8xf32> to vector<8x1xf32>
    %c0_2 = arith.constant 0 : index
    %c0_3 = arith.constant 0 : index
    %7 = vector.load %arg5[%c0_2, %c0_3] : memref<8x1xf32, #tpu.memory_space<vmem>>, vector<8x1xf32>
    %8 = arith.maximumf %7, %6 : vector<8x1xf32>
    %c0_4 = arith.constant 0 : index
    %c0_5 = arith.constant 0 : index
    %9 = vector.load %arg6[%c0_4, %c0_5] : memref<8x1xf32, #tpu.memory_space<vmem>>, vector<8x1xf32>
    %10 = arith.subf %7, %8 : vector<8x1xf32>
    %11 = math.exp %10 : vector<8x1xf32>
    %12 = arith.mulf %9, %11 : vector<8x1xf32>
    %13 = vector.broadcast %8 : vector<8x1xf32> to vector<8x16xf32>
    %14 = arith.subf %3, %13 : vector<8x16xf32>
    %15 = math.exp %14 : vector<8x16xf32>
    %cst_6 = arith.constant dense<0.000000e+00> : vector<8xf32>
    %16 = vector.multi_reduction <add>, %15, %cst_6 [1] : vector<8x16xf32> to vector<8xf32>
    %17 = vector.shape_cast %16 : vector<8xf32> to vector<8x1xf32>
    %18 = arith.addf %12, %17 : vector<8x1xf32>
    %c0_7 = arith.constant 0 : index
    %c0_8 = arith.constant 0 : index
    %19 = vector.load %arg6[%c0_7, %c0_8] : memref<8x1xf32, #tpu.memory_space<vmem>>, vector<8x1xf32>
    tpu.vector_store %arg6[%c0_7, %c0_8], %18 {strides = array<i32>} : memref<8x1xf32, #tpu.memory_space<vmem>>, vector<8x1xf32>,
    %c0_9 = arith.constant 0 : index
    %c0_10 = arith.constant 0 : index
    %20 = vector.load %arg5[%c0_9, %c0_10] : memref<8x1xf32, #tpu.memory_space<vmem>>, vector<8x1xf32>
    tpu.vector_store %arg5[%c0_9, %c0_10], %8 {strides = array<i32>} : memref<8x1xf32, #tpu.memory_space<vmem>>, vector<8x1xf32>,
    %c0_11 = arith.constant 0 : index
    %c0_12 = arith.constant 0 : index
    %21 = vector.load %arg3[%c0_11, %c0_12] : memref<8x1xi32, #tpu.memory_space<vmem>>, vector<8x1xi32>
    %c16_i32 = arith.constant 16 : i32
    %22 = arith.muli %arg1, %c16_i32 : i32
    %23 = vector.broadcast %22 : i32 to vector<8x1xi32>
    %24 = arith.subi %21, %23 : vector<8x1xi32>
    %25 = vector.broadcast %24 : vector<8x1xi32> to vector<8x16xi32>
    %26 = arith.cmpi eq, %4, %25 : vector<8x16xi32>
    %c0_13 = arith.constant 0 : index
    %c0_14 = arith.constant 0 : index
    %27 = vector.load %arg7[%c0_13, %c0_14] : memref<8x1xf32, #tpu.memory_space<vmem>>, vector<8x1xf32>
    %cst_15 = arith.constant 0.000000e+00 : f32
    %28 = vector.broadcast %cst_15 : f32 to vector<8x16xf32>
    %29 = arith.select %26, %3, %28 : vector<8x16xi1>, vector<8x16xf32>
    %cst_16 = arith.constant dense<0.000000e+00> : vector<8xf32>
    %30 = vector.multi_reduction <add>, %29, %cst_16 [1] : vector<8x16xf32> to vector<8xf32>
    %31 = vector.shape_cast %30 : vector<8xf32> to vector<8x1xf32>
    %32 = arith.addf %27, %31 : vector<8x1xf32>
    %c0_17 = arith.constant 0 : index
    %c0_18 = arith.constant 0 : index
    %33 = vector.load %arg7[%c0_17, %c0_18] : memref<8x1xf32, #tpu.memory_space<vmem>>, vector<8x1xf32>
    tpu.vector_store %arg7[%c0_17, %c0_18], %32 {strides = array<i32>} : memref<8x1xf32, #tpu.memory_space<vmem>>, vector<8x1xf32>,
    %c0_i32_19 = arith.constant 0 : i32
    %34 = arith.cmpi eq, %arg1, %c0_i32_19 : i32
    %35 = arith.extui %34 : i1 to i32
    %c0_i32_20 = arith.constant 0 : i32
    %36 = arith.cmpi ne, %35, %c0_i32_20 : i32
    scf.if %36 {
      %c0_21 = arith.constant 0 : index
      %c0_22 = arith.constant 0 : index
      %37 = vector.load %arg5[%c0_21, %c0_22] : memref<8x1xf32, #tpu.memory_space<vmem>>, vector<8x1xf32>
      %c0_23 = arith.constant 0 : index
      %c0_24 = arith.constant 0 : index
      %38 = vector.load %arg6[%c0_23, %c0_24] : memref<8x1xf32, #tpu.memory_space<vmem>>, vector<8x1xf32>
      %39 = math.log %38 : vector<8x1xf32>
      %40 = arith.addf %37, %39 : vector<8x1xf32>
      %c0_25 = arith.constant 0 : index
      %c0_26 = arith.constant 0 : index
      %41 = vector.load %arg7[%c0_25, %c0_26] : memref<8x1xf32, #tpu.memory_space<vmem>>, vector<8x1xf32>
      %42 = arith.subf %40, %41 : vector<8x1xf32>
      %c0_27 = arith.constant 0 : index
      %c0_28 = arith.constant 0 : index
      %43 = vector.load %arg4[%c0_27, %c0_28] : memref<8x1xf32, #tpu.memory_space<vmem>>, vector<8x1xf32>
      tpu.vector_store %arg4[%c0_27, %c0_28], %42 {strides = array<i32>} : memref<8x1xf32, #tpu.memory_space<vmem>>, vector<8x1xf32>,
    } else {
    }
    return
  }
  func.func @transform_0(%arg0: i32, %arg1: i32) -> (i32, i32) {
    %c0_i32 = arith.constant 0 : i32
    return %arg0, %arg1 : i32, i32
  }
  func.func @transform_1(%arg0: i32, %arg1: i32) -> (i32, i32) {
    %c0_i32 = arith.constant 0 : i32
    %c0_i32_0 = arith.constant 0 : i32
    return %arg0, %c0_i32 : i32, i32
  }
  func.func @transform_2(%arg0: i32, %arg1: i32) -> (i32, i32) {
    %c0_i32 = arith.constant 0 : i32
    %c0_i32_0 = arith.constant 0 : i32
    return %arg0, %c0_i32 : i32, i32
  }
}

</mosaic_0001>

<llo_original>
// kernel: tpu_custom_call.1
$region0: #{tpu_custom_call.1}
  #allocation0 [shape = 'u32[]', space=smem, size = 0x4, offset = 0x4, fixed_abs, tag = 'smem constant byte address 0x4 - core index']
  #allocation1 [shape = 'u32[144,128]{1,0:T(1,128)}', space=vmem, size = 0x12000, scoped, tag = 'internal scratch']
  #allocation2 [shape = 'f32[8,1]{1,0:T(8,128)}', space=vmem, size = 0x1000, scoped, tag = 'scratch operand']
  #allocation3 [shape = 'f32[8,1]{1,0:T(8,128)}', space=vmem, size = 0x1000, scoped, tag = 'scratch operand']
  #allocation4 [shape = 'f32[8,1]{1,0:T(8,128)}', space=vmem, size = 0x1000, scoped, tag = 'scratch operand']
  %s0 = inlined_call_operand.vmem [shape: f32[16,16], index: 0, kind: input, shape index: {}]
  %s1 = inlined_call_operand.vmem [shape: s32[16,1], index: 1, kind: input, shape index: {}]
  %s2 = inlined_call_operand.vmem [shape: f32[16,1], index: 2, kind: output, shape index: {}]
  %s3 = sld [smem:[#allocation0]]
  $region49: #{tpu_custom_call.1} parent=0
    _
  %s5 = ssub.s32 1, %s3
  %s6 = scalar_select 0, %s5, %s3
  loop: start=0, step=1, limit=4
  $region2: #{tpu_custom_call.1} parent=0 // loop_pre_header
    _
  $region3: #{tpu_custom_call.1} parent=0 // loop_header
    %s8 = sphi 0, %s12
    %p9 = scmp.ge.s32.totalorder %s8, 4
    %s15 = sphi 0, %s27
    %s16 = sphi 0, %s23
    %s17 = sphi 0, %s15
    %s18 = sphi 0, %s16
    %s19 = sphi 0, %s17
    %s20 = sphi 0, %s18
    %s32 = sphi 0, %s34
    %s35 = sphi 0, %s32
    %s36 = sphi 0, %s35
    %s52 = sphi 0, %s36
    %s58 = sphi 0, %s60
    %s61 = sphi 0, %s58
    %s62 = sphi 0, %s61
    %s78 = sphi 0, %s62
    %s84 = sphi 0, %s86
    %s87 = sphi 0, %s84
    %s88 = sphi 0, %s87
    %s104 = sphi 0, %s88
  $region4: #{tpu_custom_call.1} parent=0 // loop_header_branch
    %11 = sbr.rel (%p9) target = $region8
  $region5: #{tpu_custom_call.1} parent=0 // loop_body
    %s13 = ssub.s32 %s8, 1
    %s14 = ssub.s32 %s8, 2
    %s21 = sadd.s32 1, %s16
    %p22 = scmp.ge.s32.totalorder %s21, 1
    %s23 = scalar_select %p22, 0, %s21
    %s24 = sadd.s32 1, %s15
    %s25 = scalar_select %p22, %s24, %s15
    %p26 = scmp.ge.s32.totalorder %s25, 2
    %s27 = scalar_select %p26, 0, %s25
    %s28 = ssub.s32 %s15, %s27
    %s29 = ssub.s32 %s16, %s23
    %s30 = sor.u32 %s28, %s29
    %p31 = scmp.eq.s32.totalorder %s30, 0
    %s33 = sadd.s32 %s32, 1
    %s34 = scalar_select %p31, %s32, %s33
    %p37 = pneg %p31
    %p38 = scmp.eq.s32.totalorder %s8, 1
    %p39 = por %p37, %p38
    %p40 = scmp.ne.s32.totalorder %s32, %s35
    %p41 = scmp.eq.s32.totalorder %s8, 0
    %p42 = por %p40, %p41
    %p43 = scmp.ne.s32.totalorder %s32, %s35
    %p44 = scmp.eq.s32.totalorder %s13, 1
    %p45 = por %p43, %p44
    %p46 = scmp.ne.s32.totalorder %s35, %s36
    %p47 = scmp.eq.s32.totalorder %s13, 0
    %p48 = por %p46, %p47
    %p49 = scmp.ne.s32.totalorder %s35, %s36
    %p50 = scmp.eq.s32.totalorder %s14, 1
    %p51 = por %p49, %p50
    %p53 = scmp.ne.s32.totalorder %s36, %s52
    %p54 = scmp.eq.s32.totalorder %s14, 0
    %p55 = por %p53, %p54
    %s56 = ssub.s32 %s15, %s27
    %p57 = scmp.eq.s32.totalorder %s56, 0
    %s59 = sadd.s32 %s58, 1
    %s60 = scalar_select %p57, %s58, %s59
    %p63 = pneg %p57
    %p64 = scmp.eq.s32.totalorder %s8, 1
    %p65 = por %p63, %p64
    %p66 = scmp.ne.s32.totalorder %s58, %s61
    %p67 = scmp.eq.s32.totalorder %s8, 0
    %p68 = por %p66, %p67
    %p69 = scmp.ne.s32.totalorder %s58, %s61
    %p70 = scmp.eq.s32.totalorder %s13, 1
    %p71 = por %p69, %p70
    %p72 = scmp.ne.s32.totalorder %s61, %s62
    %p73 = scmp.eq.s32.totalorder %s13, 0
    %p74 = por %p72, %p73
    %p75 = scmp.ne.s32.totalorder %s61, %s62
    %p76 = scmp.eq.s32.totalorder %s14, 1
    %p77 = por %p75, %p76
    %p79 = scmp.ne.s32.totalorder %s62, %s78
    %p80 = scmp.eq.s32.totalorder %s14, 0
    %p81 = por %p79, %p80
    %s82 = ssub.s32 %s15, %s27
    %p83 = scmp.eq.s32.totalorder %s82, 0
    %s85 = sadd.s32 %s84, 1
    %s86 = scalar_select %p83, %s84, %s85
    %p89 = pneg %p83
    %p90 = scmp.eq.s32.totalorder %s8, 1
    %p91 = por %p89, %p90
    %p92 = scmp.ne.s32.totalorder %s84, %s87
    %p93 = scmp.eq.s32.totalorder %s8, 0
    %p94 = por %p92, %p93
    %p95 = scmp.ne.s32.totalorder %s84, %s87
    %p96 = scmp.eq.s32.totalorder %s13, 1
    %p97 = por %p95, %p96
    %p98 = scmp.ne.s32.totalorder %s87, %s88
    %p99 = scmp.eq.s32.totalorder %s13, 0
    %p100 = por %p98, %p99
    %p101 = scmp.ne.s32.totalorder %s87, %s88
    %p102 = scmp.eq.s32.totalorder %s14, 1
    %p103 = por %p101, %p102
    %p105 = scmp.ne.s32.totalorder %s88, %s104
    %p106 = scmp.eq.s32.totalorder %s14, 0
    %p107 = por %p105, %p106
    %p108 = scmp.le.s32.totalorder 1, %s8
    %p109 = scmp.lt.s32.totalorder %s8, 3
    %p110 = pnand %p108, %p109
    %p111 = pneg %p110
    // Predicated region
    $region9: #{tpu_custom_call.1} parent=5 // pred_check
      _
    $region10: #{tpu_custom_call.1} parent=5 // pred_check_branch
      %113 = sbr.rel (%p110) target = $region12
    $region11: #{tpu_custom_call.1} parent=5 // pred_region
      %s114 = ssub.s32 %s8, 1
    $region12: #{tpu_custom_call.1} parent=5 // pred_fallthru
      _
    %p115 = scmp.lt.s32.totalorder %s8, 2
    // Predicated region
    $region13: #{tpu_custom_call.1} parent=5 // pred_check
      %p116 = pneg %p115
    $region14: #{tpu_custom_call.1} parent=5 // pred_check_branch
      %118 = sbr.rel (%p116) target = $region16
    $region15: #{tpu_custom_call.1} parent=5 // pred_region
      // Predicated region
      $region17: #{tpu_custom_call.1} parent=15 // pred_check
        %p119 = pneg %p42
      $region18: #{tpu_custom_call.1} parent=15 // pred_check_branch
        %121 = sbr.rel (%p119) target = $region20
      $region19: #{tpu_custom_call.1} parent=15 // pred_region
        %p122 = scmp.lt.s32.totalorder %s15, 1
        %s123 = scalar_select %p122, %s15, 1
        %p124 = scmp.lt.s32.totalorder %s16, 0
        %s125 = scalar_select %p124, %s16, 0
        %s126 = sadd.s32 %s125, %s123
        %s127 = smul.addr %s126, 8
        %s128 = scalar_lea.vmem %s0, %s127
      $region20: #{tpu_custom_call.1} parent=15 // pred_fallthru
        _
      // Predicated region
      $region21: #{tpu_custom_call.1} parent=15 // pred_check
        %p129 = pneg %p68
      $region22: #{tpu_custom_call.1} parent=15 // pred_check_branch
        %131 = sbr.rel (%p129) target = $region24
      $region23: #{tpu_custom_call.1} parent=15 // pred_region
        %p132 = scmp.lt.s32.totalorder %s15, 1
        %s133 = scalar_select %p132, %s15, 1
        %s134 = smul.addr %s133, 8
        %s135 = scalar_lea.vmem %s1, %s134
      $region24: #{tpu_custom_call.1} parent=15 // pred_fallthru
        _
    $region16: #{tpu_custom_call.1} parent=5 // pred_fallthru
      _
    %p136 = scmp.le.s32.totalorder 1, %s8
    %p137 = scmp.lt.s32.totalorder %s8, 3
    %p138 = pnand %p136, %p137
    %p139 = pneg %p138
    // Predicated region
    $region25: #{tpu_custom_call.1} parent=5 // pred_check
      _
    $region26: #{tpu_custom_call.1} parent=5 // pred_check_branch
      %141 = sbr.rel (%p138) target = $region28
    $region27: #{tpu_custom_call.1} parent=5 // pred_region
      %s142 = ssub.s32 %s8, 1
      %p143 = scmp.lt.s32.totalorder %s17, 1
      %s144 = scalar_select %p143, %s17, 1
      %p145 = scmp.lt.s32.totalorder %s18, 0
      %s146 = scalar_select %p145, %s18, 0
      %s147 = sadd.s32 %s146, %s144
      %s148 = smul.addr %s147, 8
      %s149 = scalar_lea.vmem %s0, %s148
      %p150 = pneg %p48
      %p151 = pneg %p45
      %p152 = scmp.lt.s32.totalorder %s17, 1
      %s153 = scalar_select %p152, %s17, 1
      %s154 = smul.addr %s153, 8
      %s155 = scalar_lea.vmem %s1, %s154
      %p156 = pneg %p74
      %p157 = pneg %p71
      %p158 = pneg %p100
      %p159 = pneg %p97
      %p160 = scmp.lt.s32.totalorder %s17, 1
      %s161 = scalar_select %p160, %s17, 1
      %s162 = smul.addr %s161, 8
      %s163 = scalar_lea.vmem %s2, %s162
      %p164 = scmp.lt.s32.totalorder %s17, 1
      %s165 = scalar_select %p164, %s17, 1
      %p166 = scmp.lt.s32.totalorder %s18, 0
      %s167 = scalar_select %p166, %s18, 0
      %s168 = sadd.s32 %s167, %s165
      %s169 = smul.addr %s168, 8
      %s170 = scalar_lea.vmem %s0, %s169
      %p171 = scmp.lt.s32.totalorder %s17, 1
      %s172 = scalar_select %p171, %s17, 1
      %s173 = smul.addr %s172, 8
      %s174 = scalar_lea.vmem %s1, %s173
      %p175 = scmp.lt.s32.totalorder %s17, 1
      %s176 = scalar_select %p175, %s17, 1
      %s177 = smul.addr %s176, 8
      %s178 = scalar_lea.vmem %s2, %s177
      %p179 = scmp.eq.s32.totalorder %s18, 0
      // Predicated region
      $region29: #{tpu_custom_call.1} parent=27 // pred_check
        %p180 = pneg %p179
      $region30: #{tpu_custom_call.1} parent=27 // pred_check_branch
        %182 = sbr.rel (%p180) target = $region32
      $region31: #{tpu_custom_call.1} parent=27 // pred_region
        %vm183 = vcmask 7168
        %184 = vst.msk [vmem:[#allocation2] sm:$0xff] %vm183, -inf
        %185 = vst.msk [vmem:[#allocation3] sm:$0xff] %vm183, 0.0
        %186 = vst.msk [vmem:[#allocation4] sm:$0xff] %vm183, 0.0
      $region32: #{tpu_custom_call.1} parent=27 // pred_fallthru
        _
      %v187 = vld [vmem:[%s170] sm:$0xff]
      %v188 = vlaneseq
      %v189 = vand.u32 %v188, 127
      %vm190 = vcmask 130048
      %v191 = vsel %vm190, %v187, -inf
      %192 = vmax.xlane.f32.xlu0 %v191
      %v193 = vpop.xlane.xlu0 %192
      %v194 = vld [vmem:[#allocation2] sm:$0xff]
      %v195 = vmax.f32 %v194, %v193
      %v196 = vld [vmem:[#allocation3] sm:$0xff]
      %v197 = vsub.f32 %v194, %v195
      %v198 = vmul.f32 %v197, 1.442695
      %v199 = vpow.pop %v198
      %v200 = vmul.f32 %v196, %v199
      %202 = vset.pattern.permute.xlu0 0
      %203 = vperm.xlu0 %202, %v195
      %v204 = vpop.permute.xlu0 %203
      %v206 = vsub.f32 %v187, %v204
      %v207 = vmul.f32 %v206, 1.442695
      %v208 = vpow.pop %v207
      %v209 = vsel %vm190, %v208, 0.0
      %210 = vadd.xlane.f32.xlu0 %v209
      %v211 = vpop.xlane.xlu0 %210
      %v212 = vadd.f32 %v200, %v211
      %vm213 = vcmask 7168
      %214 = vst.msk [vmem:[#allocation3] sm:$0xff] %vm213, %v212
      %215 = vst.msk [vmem:[#allocation2] sm:$0xff] %vm213, %v195
      %v216 = vld [vmem:[%s174] sm:$0xff]
      %s217 = smul.u32 %s18, 16
      %v218 = vstv %s217
      %v219 = vsub.s32 %v216, %v218
      %220 = vset.pattern.permute.xlu0 0
      %221 = vperm.xlu0 %220, %v219
      %v222 = vpop.permute.xlu0 %221
      %vm223 = vcmp.eq.s32.totalorder %v189, %v222
      %v224 = vld [vmem:[#allocation4] sm:$0xff]
      %v225 = vsel %vm223, %v187, 0.0
      %v226 = vsel %vm190, %v225, 0.0
      %227 = vadd.xlane.f32.xlu0 %v226
      %v228 = vpop.xlane.xlu0 %227
      %v229 = vadd.f32 %v224, %v228
      %230 = vst.msk [vmem:[#allocation4] sm:$0xff] %vm213, %v229
      // Predicated region
      $region33: #{tpu_custom_call.1} parent=27 // pred_check
        %p231 = pneg %p179
      $region34: #{tpu_custom_call.1} parent=27 // pred_check_branch
        %233 = sbr.rel (%p231) target = $region36
      $region35: #{tpu_custom_call.1} parent=27 // pred_region
        %v234 = vld [vmem:[#allocation2] sm:$0xff]
        %v235 = vld [vmem:[#allocation3] sm:$0xff]
        %v236 = vlog2.pop %v235
        %v237 = vmul.f32 %v236, 0.6931472
        %v238 = vadd.f32 %v234, %v237
        %v239 = vld [vmem:[#allocation4] sm:$0xff]
        %v240 = vsub.f32 %v238, %v239
        %241 = vst.msk [vmem:[%s178] sm:$0xff] %vm213, %v240
      $region36: #{tpu_custom_call.1} parent=27 // pred_fallthru
        _
      %p242 = scmp.lt.s32.totalorder %s17, 1
      %s243 = scalar_select %p242, %s17, 1
      %s244 = smul.addr %s243, 8
      %s245 = scalar_lea.vmem %s2, %s244
      // Predicated region
      $region37: #{tpu_custom_call.1} parent=27 // pred_check
        %p246 = pneg %p97
      $region38: #{tpu_custom_call.1} parent=27 // pred_check_branch
        %248 = sbr.rel (%p246) target = $region40
      $region39: #{tpu_custom_call.1} parent=27 // pred_region
        _
      $region40: #{tpu_custom_call.1} parent=27 // pred_fallthru
        _
    $region28: #{tpu_custom_call.1} parent=5 // pred_fallthru
      _
    %p249 = scmp.le.s32.totalorder 2, %s8
    // Predicated region
    $region41: #{tpu_custom_call.1} parent=5 // pred_check
      %p250 = pneg %p249
    $region42: #{tpu_custom_call.1} parent=5 // pred_check_branch
      %252 = sbr.rel (%p250) target = $region44
    $region43: #{tpu_custom_call.1} parent=5 // pred_region
      %s253 = ssub.s32 %s8, 2
      // Predicated region
      $region45: #{tpu_custom_call.1} parent=43 // pred_check
        %p254 = pneg %p103
      $region46: #{tpu_custom_call.1} parent=43 // pred_check_branch
        %256 = sbr.rel (%p254) target = $region48
      $region47: #{tpu_custom_call.1} parent=43 // pred_region
        %p257 = scmp.lt.s32.totalorder %s19, 1
        %s258 = scalar_select %p257, %s19, 1
        %s259 = smul.addr %s258, 8
        %s260 = scalar_lea.vmem %s2, %s259
      $region48: #{tpu_custom_call.1} parent=43 // pred_fallthru
        _
    $region44: #{tpu_custom_call.1} parent=5 // pred_fallthru
      _
  $region6: #{tpu_custom_call.1} parent=0 // loop_footer
    %s12 = sadd.s32 1, %s8
  $region7: #{tpu_custom_call.1} parent=0 // loop_footer_branch
    %7 = sbr.rel target = $region3
  $region8: #{tpu_custom_call.1} parent=0 // loop_exit
    _

</llo_original>
